<compile_context>
chip_gen: v6e
topology: v6e:2x2x1
jax: 0.10.0
libtpu: 0.0.40
codegen_flags: <defaults>
</compile_context>

<pallas_src>
import functools

import jax
import jax.numpy as jnp
from jax.experimental import pallas as pl
from jax.experimental.pallas import tpu as pltpu


def _round_up(n, m):
    return ((n + m - 1) // m) * m


def dqn_mlp_kernel(x_ref, w_ref, b_ref, o_ref):
    """Fused 3-layer MLP (Linear->ReLU->Linear->ReLU->Linear) on one batch tile.

    x_ref : (TB, D_in)  f32   -- unpadded feature dim; cast + zero-extended here
    w_ref : (3, DP, DP) bf16  -- packed, transposed, zero-padded weights
    b_ref : (3, 1, DP)  f32   -- packed, zero-padded biases
    o_ref : (TB, DP)    bf16  -- lane-dense padded output
    """
    dp = w_ref.shape[1]

    x = x_ref[...].astype(jnp.bfloat16)                     # in-kernel cast
    d_in = x.shape[1]
    if d_in < dp:                                           # zero-extend K to DP
        x = jnp.concatenate(
            [x, jnp.zeros((x.shape[0], dp - d_in), jnp.bfloat16)], axis=1)

    h1 = jnp.dot(x, w_ref[0], preferred_element_type=jnp.float32)
    h1 = jnp.maximum(h1 + b_ref[0], 0.0)                    # f32 tail (v5e safe)

    h2 = jnp.dot(h1.astype(jnp.bfloat16), w_ref[1],
                 preferred_element_type=jnp.float32)
    h2 = jnp.maximum(h2 + b_ref[1], 0.0)

    h3 = jnp.dot(h2.astype(jnp.bfloat16), w_ref[2],
                 preferred_element_type=jnp.float32)
    h3 = h3 + b_ref[2]

    o_ref[...] = h3.astype(o_ref.dtype)                     # lane-dense bf16 store


def prepare_params(params):
    """One-time preprocessing of PyTorch-convention params.

    - transpose each W from (out, in) -> (in, out)
    - zero-pad all feature dims to a common 128-multiple DP (zero padding is
      required so it cannot leak through ReLU into the next layer)
    - stack weights into one (3, DP, DP) bf16 slab, biases into (3, 1, DP) f32

    Returns (packed_dict, d_out) with d_out a plain Python int kept OUT of the
    jitted pytree so the final output slice stays static.
    """
    ws = [params["w1"], params["w2"], params["w3"]]
    bs = [params["b1"], params["b2"], params["b3"]]
    dims = [ws[0].shape[1]] + [w.shape[0] for w in ws]      # d_in, h1, h2, d_out
    dp = max(_round_up(int(d), 128) for d in dims)

    w_pack = jnp.zeros((3, dp, dp), jnp.float32)
    b_pack = jnp.zeros((3, 1, dp), jnp.float32)
    for l, (w, b) in enumerate(zip(ws, bs)):
        wt = w.T                                            # (in, out)
        w_pack = w_pack.at[l, :wt.shape[0], :wt.shape[1]].set(wt)
        b_pack = b_pack.at[l, 0, :b.shape[0]].set(b)

    packed = {"w": w_pack.astype(jnp.bfloat16), "b": b_pack}
    return packed, int(ws[2].shape[0])


@functools.partial(jax.jit, static_argnames=("d_out", "tb"))
def dqn_forward(x, p, *, d_out, tb=512):
    """x: [B, D_in] float32.  p: packed params from prepare_params."""
    B, d_in = x.shape
    dp = p["w"].shape[1]

    # One big batch tile (multiple of 8 sublanes), fewest possible grid steps.
    tb = max(8, min(tb, _round_up(B, 8)))
    bp = _round_up(B, tb)
    xp = x if bp == B else jnp.pad(x, ((0, bp - B), (0, 0)))

    cost = pl.CostEstimate(
        flops=2 * bp * dp * dp * 3,
        transcendentals=0,
        bytes_accessed=(bp * d_in * 4          # x (f32)
                        + 3 * dp * dp * 2      # packed bf16 weights
                        + 3 * dp * 4           # packed f32 biases
                        + bp * dp * 2),        # bf16 output
    )

    out = pl.pallas_call(
        dqn_mlp_kernel,
        out_shape=jax.ShapeDtypeStruct((bp, dp), jnp.bfloat16),
        grid_spec=pl.GridSpec(
            grid=(bp // tb,),
            in_specs=[
                pl.BlockSpec((tb, d_in), lambda i: (i, 0)),           # x tile
                pl.BlockSpec((3, dp, dp), lambda i: (0, 0, 0),
                             pipeline_mode=pl.Buffered(1)),           # resident W
                pl.BlockSpec((3, 1, dp), lambda i: (0, 0, 0),
                             pipeline_mode=pl.Buffered(1)),           # resident b
            ],
            out_specs=pl.BlockSpec((tb, dp), lambda i: (i, 0)),
        ),
        compiler_params=pltpu.CompilerParams(
            dimension_semantics=("parallel",)),
        cost_estimate=cost,
    )(xp, p["w"], p["b"])

    # B, d_out are static Python ints -> static slice (fixes the jit failure).
    return out[:B, :d_out].astype(jnp.float32)


def reference_forward(x, params):
    """Pure-JAX f32 reference mimicking the PyTorch sequential forward."""
    h = x
    h = jnp.maximum(h @ params["w1"].T + params["b1"], 0.0)
    h = jnp.maximum(h @ params["w2"].T + params["b2"], 0.0)
    h = h @ params["w3"].T + params["b3"]
    return h


def init_params(key, d_in, h1, h2, d_out):
    """Deterministic init; PyTorch Linear convention: W is (out, in)."""
    ks = jax.random.split(key, 6)
    scale = lambda fan_in: 1.0 / jnp.sqrt(fan_in)
    return {
        "w1": jax.random.uniform(ks[0], (h1, d_in), jnp.float32,
                                 -scale(d_in), scale(d_in)),
        "b1": jax.random.uniform(ks[1], (h1,), jnp.float32,
                                 -scale(d_in), scale(d_in)),
        "w2": jax.random.uniform(ks[2], (h2, h1), jnp.float32,
                                 -scale(h1), scale(h1)),
        "b2": jax.random.uniform(ks[3], (h2,), jnp.float32,
                                 -scale(h1), scale(h1)),
        "w3": jax.random.uniform(ks[4], (d_out, h2), jnp.float32,
                                 -scale(h2), scale(h2)),
        "b3": jax.random.uniform(ks[5], (d_out,), jnp.float32,
                                 -scale(h2), scale(h2)),
    }


if __name__ == "__main__":
    key = jax.random.PRNGKey(0)
    kx, kp = jax.random.split(key)

    # Small blackjack-style DQN: state features -> hidden -> hidden -> Q-values.
    B, D_IN, H1, H2, D_OUT = 256, 32, 64, 64, 4

    x = jax.random.normal(kx, (B, D_IN), jnp.float32)
    params = init_params(kp, D_IN, H1, H2, D_OUT)

    # One-time parameter preprocessing (transpose / pad / pack / bf16).
    packed, d_out = prepare_params(params)
    packed = jax.tree_util.tree_map(jax.block_until_ready, packed)

    out = dqn_forward(x, packed, d_out=d_out)
    out = jax.block_until_ready(out)

    ref = reference_forward(x, params)
    assert out.shape == (B, D_OUT)
    # bf16 weights/activations/output vs f32 reference -> widened tolerance.
    assert jnp.allclose(out, ref, atol=5e-2, rtol=5e-2), "mismatch vs reference"

    print("KERNEL_OK")
</pallas_src>

<mosaic_0001>
module attributes {stable_mosaic.version = 11 : i64} {
  func.func @dqn_mlp_kernel(%arg0: i32, %arg1: memref<256x32xf32, #tpu.memory_space<vmem>>, %arg2: memref<3x128x128xbf16, #tpu.memory_space<vmem>>, %arg3: memref<3x1x128xf32, #tpu.memory_space<vmem>>, %arg4: memref<256x128xbf16, #tpu.memory_space<vmem>>) attributes {dimension_semantics = [#tpu.dimension_semantics<parallel>], iteration_bounds = array<i64: 1>, scalar_prefetch = 0 : i64, scratch_operands = 0 : i64, tpu.core_type = #tpu.core_type<tc>, window_params = [{transform_indices = @transform_0, window_bounds = array<i64: 256, 32>}, {pipeline_mode = #tpu.pipeline_mode<synchronous>, transform_indices = @transform_1, window_bounds = array<i64: 3, 128, 128>}, {pipeline_mode = #tpu.pipeline_mode<synchronous>, transform_indices = @transform_2, window_bounds = array<i64: 3, 1, 128>}, {transform_indices = @transform_3, window_bounds = array<i64: 256, 128>}]} {
    %c0 = arith.constant 0 : index
    %c0_0 = arith.constant 0 : index
    %0 = vector.load %arg1[%c0, %c0_0] : memref<256x32xf32, #tpu.memory_space<vmem>>, vector<256x32xf32>
    %1 = arith.truncf %0 : vector<256x32xf32> to vector<256x32xbf16>
    %cst = arith.constant 0.000000e+00 : bf16
    %2 = vector.broadcast %cst : bf16 to vector<256x96xbf16>
    %3 = tpu.concatenate %1, %2 in 1 : vector<256x32xbf16>, vector<256x96xbf16> -> vector<256x128xbf16>
    %c0_1 = arith.constant 0 : index
    %c0_2 = arith.constant 0 : index
    %c0_3 = arith.constant 0 : index
    %4 = vector.load %arg2[%c0_1, %c0_2, %c0_3] : memref<3x128x128xbf16, #tpu.memory_space<vmem>>, vector<1x128x128xbf16>
    %5 = vector.shape_cast %4 : vector<1x128x128xbf16> to vector<128x128xbf16>
    %cst_4 = arith.constant dense<0.000000e+00> : vector<256x128xf32>
    %6 = tpu.matmul %3, %5, %cst_4 {dimension_numbers = #tpu.dot_dimension_numbers<[1], [0], [0], [1], [0, 0, 1, 1], [], []>} : vector<256x128xbf16>, vector<128x128xbf16>, vector<256x128xf32> -> vector<256x128xf32>
    %c0_5 = arith.constant 0 : index
    %c0_6 = arith.constant 0 : index
    %c0_7 = arith.constant 0 : index
    %7 = vector.load %arg3[%c0_5, %c0_6, %c0_7] : memref<3x1x128xf32, #tpu.memory_space<vmem>>, vector<1x1x128xf32>
    %8 = vector.shape_cast %7 : vector<1x1x128xf32> to vector<1x128xf32>
    %9 = vector.broadcast %8 : vector<1x128xf32> to vector<256x128xf32>
    %10 = arith.addf %6, %9 : vector<256x128xf32>
    %cst_8 = arith.constant 0.000000e+00 : f32
    %11 = vector.broadcast %cst_8 : f32 to vector<256x128xf32>
    %12 = arith.maximumf %10, %11 : vector<256x128xf32>
    %13 = arith.truncf %12 : vector<256x128xf32> to vector<256x128xbf16>
    %c1 = arith.constant 1 : index
    %c0_9 = arith.constant 0 : index
    %c0_10 = arith.constant 0 : index
    %14 = vector.load %arg2[%c1, %c0_9, %c0_10] : memref<3x128x128xbf16, #tpu.memory_space<vmem>>, vector<1x128x128xbf16>
    %15 = vector.shape_cast %14 : vector<1x128x128xbf16> to vector<128x128xbf16>
    %cst_11 = arith.constant dense<0.000000e+00> : vector<256x128xf32>
    %16 = tpu.matmul %13, %15, %cst_11 {dimension_numbers = #tpu.dot_dimension_numbers<[1], [0], [0], [1], [0, 0, 1, 1], [], []>} : vector<256x128xbf16>, vector<128x128xbf16>, vector<256x128xf32> -> vector<256x128xf32>
    %c1_12 = arith.constant 1 : index
    %c0_13 = arith.constant 0 : index
    %c0_14 = arith.constant 0 : index
    %17 = vector.load %arg3[%c1_12, %c0_13, %c0_14] : memref<3x1x128xf32, #tpu.memory_space<vmem>>, vector<1x1x128xf32>
    %18 = vector.shape_cast %17 : vector<1x1x128xf32> to vector<1x128xf32>
    %19 = vector.broadcast %18 : vector<1x128xf32> to vector<256x128xf32>
    %20 = arith.addf %16, %19 : vector<256x128xf32>
    %cst_15 = arith.constant 0.000000e+00 : f32
    %21 = vector.broadcast %cst_15 : f32 to vector<256x128xf32>
    %22 = arith.maximumf %20, %21 : vector<256x128xf32>
    %23 = arith.truncf %22 : vector<256x128xf32> to vector<256x128xbf16>
    %c2 = arith.constant 2 : index
    %c0_16 = arith.constant 0 : index
    %c0_17 = arith.constant 0 : index
    %24 = vector.load %arg2[%c2, %c0_16, %c0_17] : memref<3x128x128xbf16, #tpu.memory_space<vmem>>, vector<1x128x128xbf16>
    %25 = vector.shape_cast %24 : vector<1x128x128xbf16> to vector<128x128xbf16>
    %cst_18 = arith.constant dense<0.000000e+00> : vector<256x128xf32>
    %26 = tpu.matmul %23, %25, %cst_18 {dimension_numbers = #tpu.dot_dimension_numbers<[1], [0], [0], [1], [0, 0, 1, 1], [], []>} : vector<256x128xbf16>, vector<128x128xbf16>, vector<256x128xf32> -> vector<256x128xf32>
    %c2_19 = arith.constant 2 : index
    %c0_20 = arith.constant 0 : index
    %c0_21 = arith.constant 0 : index
    %27 = vector.load %arg3[%c2_19, %c0_20, %c0_21] : memref<3x1x128xf32, #tpu.memory_space<vmem>>, vector<1x1x128xf32>
    %28 = vector.shape_cast %27 : vector<1x1x128xf32> to vector<1x128xf32>
    %29 = vector.broadcast %28 : vector<1x128xf32> to vector<256x128xf32>
    %30 = arith.addf %26, %29 : vector<256x128xf32>
    %31 = arith.truncf %30 : vector<256x128xf32> to vector<256x128xbf16>
    %c0_22 = arith.constant 0 : index
    %c0_23 = arith.constant 0 : index
    %32 = vector.load %arg4[%c0_22, %c0_23] : memref<256x128xbf16, #tpu.memory_space<vmem>>, vector<256x128xbf16>
    tpu.vector_store %arg4[%c0_22, %c0_23], %31 {strides = array<i32>} : memref<256x128xbf16, #tpu.memory_space<vmem>>, vector<256x128xbf16>,
    return
  }
  func.func @transform_0(%arg0: i32) -> (i32, i32) {
    %c0_i32 = arith.constant 0 : i32
    %c0_i32_0 = arith.constant 0 : i32
    return %arg0, %c0_i32 : i32, i32
  }
  func.func @transform_1(%arg0: i32) -> (i32, i32, i32) {
    %c0_i32 = arith.constant 0 : i32
    %c0_i32_0 = arith.constant 0 : i32
    %c0_i32_1 = arith.constant 0 : i32
    %c0_i32_2 = arith.constant 0 : i32
    return %c0_i32, %c0_i32_0, %c0_i32_1 : i32, i32, i32
  }
  func.func @transform_2(%arg0: i32) -> (i32, i32, i32) {
    %c0_i32 = arith.constant 0 : i32
    %c0_i32_0 = arith.constant 0 : i32
    %c0_i32_1 = arith.constant 0 : i32
    %c0_i32_2 = arith.constant 0 : i32
    return %c0_i32, %c0_i32_0, %c0_i32_1 : i32, i32, i32
  }
  func.func @transform_3(%arg0: i32) -> (i32, i32) {
    %c0_i32 = arith.constant 0 : i32
    %c0_i32_0 = arith.constant 0 : i32
    return %arg0, %c0_i32 : i32, i32
  }
}

</mosaic_0001>

<llo_original>
// kernel: dqn_forward.1
$region0: #{dqn_forward.1}
  #allocation0 [shape = 'u32[]', space=smem, size = 0x4, offset = 0x4, fixed_abs, tag = 'smem constant byte address 0x4 - core index']
  #allocation1 [shape = 'u32[144,128]{1,0:T(1,128)}', space=vmem, size = 0x12000, scoped, tag = 'internal scratch']
  %s0 = inlined_call_operand.vmem [shape: f32[256,32], index: 0, kind: input, shape index: {}]
  %s1 = inlined_call_operand.vmem [shape: bf16[3,128,128], index: 1, kind: input, shape index: {}]
  %s2 = inlined_call_operand.vmem [shape: f32[3,1,128], index: 2, kind: input, shape index: {}]
  %s3 = inlined_call_operand.vmem [shape: bf16[256,128], index: 3, kind: output, shape index: {}]
  %s4 = sld [smem:[#allocation0]]
  $region22: #{dqn_forward.1} parent=0
    _
  %s6 = ssub.s32 1, %s4
  %s7 = scalar_select 0, %s6, %s4
  // Predicated region
  $region2: #{dqn_forward.1} parent=0 // pred_check
    _
  $region3: #{dqn_forward.1} parent=0 // pred_check_branch
    %9 = sbr.rel (0) target = $region5
  $region4: #{dqn_forward.1} parent=0 // pred_region
    _
  $region5: #{dqn_forward.1} parent=0 // pred_fallthru
    _
  // Predicated region
  $region6: #{dqn_forward.1} parent=0 // pred_check
    _
  $region7: #{dqn_forward.1} parent=0 // pred_check_branch
    %11 = sbr.rel (0) target = $region9
  $region8: #{dqn_forward.1} parent=0 // pred_region
    _
  $region9: #{dqn_forward.1} parent=0 // pred_fallthru
    _
  // Predicated region
  $region10: #{dqn_forward.1} parent=0 // pred_check
    _
  $region11: #{dqn_forward.1} parent=0 // pred_check_branch
    %13 = sbr.rel (0) target = $region13
  $region12: #{dqn_forward.1} parent=0 // pred_region
    _
  $region13: #{dqn_forward.1} parent=0 // pred_fallthru
    _
  %v15 = vld [vmem:[%s0] sm:$0xff]
  %v16 = vld [vmem:[%s0 + $0x8] sm:$0xff]
  %v17 = vld [vmem:[%s0 + $0x10] sm:$0xff]
  %v18 = vld [vmem:[%s0 + $0x18] sm:$0xff]
  %v19 = vld [vmem:[%s0 + $0x20] sm:$0xff]
  %v20 = vld [vmem:[%s0 + $0x28] sm:$0xff]
  %v21 = vld [vmem:[%s0 + $0x30] sm:$0xff]
  %v22 = vld [vmem:[%s0 + $0x38] sm:$0xff]
  %v23 = vld [vmem:[%s0 + $0x40] sm:$0xff]
  %v24 = vld [vmem:[%s0 + $0x48] sm:$0xff]
  %v25 = vld [vmem:[%s0 + $0x50] sm:$0xff]
  %v26 = vld [vmem:[%s0 + $0x58] sm:$0xff]
  %v27 = vld [vmem:[%s0 + $0x60] sm:$0xff]
  %v28 = vld [vmem:[%s0 + $0x68] sm:$0xff]
  %v29 = vld [vmem:[%s0 + $0x70] sm:$0xff]
  %v30 = vld [vmem:[%s0 + $0x78] sm:$0xff]
  %v31 = vld [vmem:[%s0 + $0x80] sm:$0xff]
  %v32 = vld [vmem:[%s0 + $0x88] sm:$0xff]
  %v33 = vld [vmem:[%s0 + $0x90] sm:$0xff]
  %v34 = vld [vmem:[%s0 + $0x98] sm:$0xff]
  %v35 = vld [vmem:[%s0 + $0xa0] sm:$0xff]
  %v36 = vld [vmem:[%s0 + $0xa8] sm:$0xff]
  %v37 = vld [vmem:[%s0 + $0xb0] sm:$0xff]
  %v38 = vld [vmem:[%s0 + $0xb8] sm:$0xff]
  %v39 = vld [vmem:[%s0 + $0xc0] sm:$0xff]
  %v40 = vld [vmem:[%s0 + $0xc8] sm:$0xff]
  %v41 = vld [vmem:[%s0 + $0xd0] sm:$0xff]
  %v42 = vld [vmem:[%s0 + $0xd8] sm:$0xff]
  %v43 = vld [vmem:[%s0 + $0xe0] sm:$0xff]
  %v44 = vld [vmem:[%s0 + $0xe8] sm:$0xff]
  %v45 = vld [vmem:[%s0 + $0xf0] sm:$0xff]
  %v46 = vld [vmem:[%s0 + $0xf8] sm:$0xff]
  %v47 = vpack.c.bf16 %v16, %v15
  %v48 = vpack.c.bf16 %v18, %v17
  %v49 = vpack.c.bf16 %v20, %v19
  %v50 = vpack.c.bf16 %v22, %v21
  %v51 = vpack.c.bf16 %v24, %v23
  %v52 = vpack.c.bf16 %v26, %v25
  %v53 = vpack.c.bf16 %v28, %v27
  %v54 = vpack.c.bf16 %v30, %v29
  %v55 = vpack.c.bf16 %v32, %v31
  %v56 = vpack.c.bf16 %v34, %v33
  %v57 = vpack.c.bf16 %v36, %v35
  %v58 = vpack.c.bf16 %v38, %v37
  %v59 = vpack.c.bf16 %v40, %v39
  %v60 = vpack.c.bf16 %v42, %v41
  %v61 = vpack.c.bf16 %v44, %v43
  %v62 = vpack.c.bf16 %v46, %v45
  %vm63 = vcmask 261120
  %v66 = vsel %vm63, %v47, 0
  %v69 = vsel %vm63, %v48, 0
  %v72 = vsel %vm63, %v49, 0
  %v75 = vsel %vm63, %v50, 0
  %v78 = vsel %vm63, %v51, 0
  %v81 = vsel %vm63, %v52, 0
  %v84 = vsel %vm63, %v53, 0
  %v87 = vsel %vm63, %v54, 0
  %v90 = vsel %vm63, %v55, 0
  %v93 = vsel %vm63, %v56, 0
  %v96 = vsel %vm63, %v57, 0
  %v99 = vsel %vm63, %v58, 0
  %v102 = vsel %vm63, %v59, 0
  %v105 = vsel %vm63, %v60, 0
  %v108 = vsel %vm63, %v61, 0
  %v111 = vsel %vm63, %v62, 0
  %v113 = vld [vmem:[%s1] sm:$0xf]
  %v114 = vld [vmem:[%s1 + $0x4] sm:$0xf]
  %v115 = vld [vmem:[%s1 + $0x8] sm:$0xf]
  %v116 = vld [vmem:[%s1 + $0xc] sm:$0xf]
  %v117 = vld [vmem:[%s1 + $0x10] sm:$0xf]
  %v118 = vld [vmem:[%s1 + $0x14] sm:$0xf]
  %v119 = vld [vmem:[%s1 + $0x18] sm:$0xf]
  %v120 = vld [vmem:[%s1 + $0x1c] sm:$0xf]
  %v121 = vld [vmem:[%s1 + $0x20] sm:$0xf]
  %v122 = vld [vmem:[%s1 + $0x24] sm:$0xf]
  %v123 = vld [vmem:[%s1 + $0x28] sm:$0xf]
  %v124 = vld [vmem:[%s1 + $0x2c] sm:$0xf]
  %v125 = vld [vmem:[%s1 + $0x30] sm:$0xf]
  %v126 = vld [vmem:[%s1 + $0x34] sm:$0xf]
  %v127 = vld [vmem:[%s1 + $0x38] sm:$0xf]
  %v128 = vld [vmem:[%s1 + $0x3c] sm:$0xf]
  %v129 = vld [vmem:[%s2] sm:$0x1]
  %v131 = vlaneseq
  %v132 = vshrl.u32 %v131, 7
  %v133 = vsub.s32 0, %v132
  %v134 = vrot.slane %v129, %v133
  %v152 = vunpack.c.l.b16 %v113
  %v153 = vunpack.c.l.b16 %v114
  %v154 = vunpack.c.l.b16 %v115
  %v155 = vunpack.c.l.b16 %v116
  %v156 = vunpack.c.l.b16 %v117
  %v157 = vunpack.c.l.b16 %v118
  %v158 = vunpack.c.l.b16 %v119
  %v159 = vunpack.c.l.b16 %v120
  %v160 = vunpack.c.l.b16 %v121
  %v161 = vunpack.c.l.b16 %v122
  %v162 = vunpack.c.l.b16 %v123
  %v163 = vunpack.c.l.b16 %v124
  %v164 = vunpack.c.l.b16 %v125
  %v165 = vunpack.c.l.b16 %v126
  %v166 = vunpack.c.l.b16 %v127
  %v167 = vunpack.c.l.b16 %v128
  %v168 = vpack.c.b16 %v153, %v152
  %v169 = vpack.c.b16 %v155, %v154
  %v170 = vpack.c.b16 %v157, %v156
  %v171 = vpack.c.b16 %v159, %v158
  %v172 = vpack.c.b16 %v161, %v160
  %v173 = vpack.c.b16 %v163, %v162
  %v174 = vpack.c.b16 %v165, %v164
  %v175 = vpack.c.b16 %v167, %v166
  %184 = vmatprep.subr.bf16.mxu0 0
  %185 = vmatpush1.bf16.msra.mxu0 %v175
  %186 = vmatprep.subr.bf16.mxu0 0
  %187 = vmatpush1.bf16.msra.mxu0 %v174
  %188 = vmatprep.subr.bf16.mxu0 0
  %189 = vmatpush1.bf16.msra.mxu0 %v173
  %190 = vmatprep.subr.bf16.mxu0 0
  %191 = vmatpush1.bf16.msra.mxu0 %v172
  %192 = vmatprep.subr.bf16.mxu0 0
  %193 = vmatpush1.bf16.msra.mxu0 %v171
  %194 = vmatprep.subr.bf16.mxu0 0
  %195 = vmatpush1.bf16.msra.mxu0 %v170
  %196 = vmatprep.subr.bf16.mxu0 0
  %197 = vmatpush1.bf16.msra.mxu0 %v169
  %198 = vmatprep.subr.bf16.mxu0 0
  %199 = vmatpush1.bf16.msra.mxu0 %v168
  %200 = vmatprep.subr.bf16.mxu0 0
  %201 = vmatpush2.bf16.msra.mxu0 0
  %202 = vmatprep.subr.bf16.mxu0 0
  %203 = vmatpush2.bf16.msra.mxu0 0
  %204 = vmatprep.subr.bf16.mxu0 0
  %205 = vmatpush2.bf16.msra.mxu0 0
  %206 = vmatprep.subr.bf16.mxu0 0
  %207 = vmatpush2.bf16.msra.mxu0 0
  %208 = vmatprep.subr.bf16.mxu0 0
  %209 = vmatpush2.bf16.msra.mxu0 0
  %210 = vmatprep.subr.bf16.mxu0 0
  %211 = vmatpush2.bf16.msra.mxu0 0
  %212 = vmatprep.subr.bf16.mxu0 0
  %213 = vmatpush2.bf16.msra.mxu0 0
  %214 = vmatprep.subr.bf16.mxu0 0
  %215 = vmatpush2.bf16.msra.mxu0 0
  %216 = vmatprep.mubr.bf16.mxu0 0
  %217 = vmatmul.mubr.bf16.gmra.mxu0 %v66
  %v218 = vpop.f32.mrf.mxu0
  %v219 = vadd.f32 %v134, %v218
  %v220 = vpop.f32.mrf.mxu0
  %v221 = vpop.f32.mrf.mxu0
  %v222 = vadd.f32 %v134, %v221
  %v223 = vpop.f32.mrf.mxu0
  %224 = vmatprep.mubr.bf16.mxu0 0
  %225 = vmatmul.mubr.bf16.gmra.mxu0 %v69
  %v226 = vpop.f32.mrf.mxu0
  %v227 = vadd.f32 %v134, %v226
  %v228 = vpop.f32.mrf.mxu0
  %v229 = vpop.f32.mrf.mxu0
  %v230 = vadd.f32 %v134, %v229
  %v231 = vpop.f32.mrf.mxu0
  %232 = vmatprep.mubr.bf16.mxu0 0
  %233 = vmatmul.mubr.bf16.gmra.mxu0 %v72
  %v234 = vpop.f32.mrf.mxu0
  %v235 = vadd.f32 %v134, %v234
  %v236 = vpop.f32.mrf.mxu0
  %v237 = vpop.f32.mrf.mxu0
  %v238 = vadd.f32 %v134, %v237
  %v239 = vpop.f32.mrf.mxu0
  %240 = vmatprep.mubr.bf16.mxu0 0
  %241 = vmatmul.mubr.bf16.gmra.mxu0 %v75
  %v242 = vpop.f32.mrf.mxu0
  %v243 = vadd.f32 %v134, %v242
  %v244 = vpop.f32.mrf.mxu0
  %v245 = vpop.f32.mrf.mxu0
  %v246 = vadd.f32 %v134, %v245
  %v247 = vpop.f32.mrf.mxu0
  %248 = vmatprep.mubr.bf16.mxu0 0
  %249 = vmatmul.mubr.bf16.gmra.mxu0 %v78
  %v250 = vpop.f32.mrf.mxu0
  %v251 = vadd.f32 %v134, %v250
  %v252 = vpop.f32.mrf.mxu0
  %v253 = vpop.f32.mrf.mxu0
  %v254 = vadd.f32 %v134, %v253
  %v255 = vpop.f32.mrf.mxu0
  %256 = vmatprep.mubr.bf16.mxu0 0
  %257 = vmatmul.mubr.bf16.gmra.mxu0 %v81
  %v258 = vpop.f32.mrf.mxu0
  %v259 = vadd.f32 %v134, %v258
  %v260 = vpop.f32.mrf.mxu0
  %v261 = vpop.f32.mrf.mxu0
  %v262 = vadd.f32 %v134, %v261
  %v263 = vpop.f32.mrf.mxu0
  %264 = vmatprep.mubr.bf16.mxu0 0
  %265 = vmatmul.mubr.bf16.gmra.mxu0 %v84
  %v266 = vpop.f32.mrf.mxu0
  %v267 = vadd.f32 %v134, %v266
  %v268 = vpop.f32.mrf.mxu0
  %v269 = vpop.f32.mrf.mxu0
  %v270 = vadd.f32 %v134, %v269
  %v271 = vpop.f32.mrf.mxu0
  %272 = vmatprep.mubr.bf16.mxu0 0
  %273 = vmatmul.mubr.bf16.gmra.mxu0 %v87
  %v274 = vpop.f32.mrf.mxu0
  %v275 = vadd.f32 %v134, %v274
  %v276 = vpop.f32.mrf.mxu0
  %v277 = vpop.f32.mrf.mxu0
  %v278 = vadd.f32 %v134, %v277
  %v279 = vpop.f32.mrf.mxu0
  %280 = vmatprep.mubr.bf16.mxu0 0
  %281 = vmatmul.mubr.bf16.gmra.mxu0 %v90
  %v282 = vpop.f32.mrf.mxu0
  %v283 = vadd.f32 %v134, %v282
  %v284 = vpop.f32.mrf.mxu0
  %v285 = vpop.f32.mrf.mxu0
  %v286 = vadd.f32 %v134, %v285
  %v287 = vpop.f32.mrf.mxu0
  %288 = vmatprep.mubr.bf16.mxu0 0
  %289 = vmatmul.mubr.bf16.gmra.mxu0 %v93
  %v290 = vpop.f32.mrf.mxu0
  %v291 = vadd.f32 %v134, %v290
  %v292 = vpop.f32.mrf.mxu0
  %v293 = vpop.f32.mrf.mxu0
  %v294 = vadd.f32 %v134, %v293
  %v295 = vpop.f32.mrf.mxu0
  %296 = vmatprep.mubr.bf16.mxu0 0
  %297 = vmatmul.mubr.bf16.gmra.mxu0 %v96
  %v298 = vpop.f32.mrf.mxu0
  %v299 = vadd.f32 %v134, %v298
  %v300 = vpop.f32.mrf.mxu0
  %v301 = vpop.f32.mrf.mxu0
  %v302 = vadd.f32 %v134, %v301
  %v303 = vpop.f32.mrf.mxu0
  %304 = vmatprep.mubr.bf16.mxu0 0
  %305 = vmatmul.mubr.bf16.gmra.mxu0 %v99
  %v306 = vpop.f32.mrf.mxu0
  %v307 = vadd.f32 %v134, %v306
  %v308 = vpop.f32.mrf.mxu0
  %v309 = vpop.f32.mrf.mxu0
  %v310 = vadd.f32 %v134, %v309
  %v311 = vpop.f32.mrf.mxu0
  %312 = vmatprep.mubr.bf16.mxu0 0
  %313 = vmatmul.mubr.bf16.gmra.mxu0 %v102
  %v314 = vpop.f32.mrf.mxu0
  %v315 = vadd.f32 %v134, %v314
  %v316 = vpop.f32.mrf.mxu0
  %v317 = vpop.f32.mrf.mxu0
  %v318 = vadd.f32 %v134, %v317
  %v319 = vpop.f32.mrf.mxu0
  %320 = vmatprep.mubr.bf16.mxu0 0
  %321 = vmatmul.mubr.bf16.gmra.mxu0 %v105
  %v322 = vpop.f32.mrf.mxu0
  %v323 = vadd.f32 %v134, %v322
  %v324 = vpop.f32.mrf.mxu0
  %v325 = vpop.f32.mrf.mxu0
  %v326 = vadd.f32 %v134, %v325
  %v327 = vpop.f32.mrf.mxu0
  %328 = vmatprep.mubr.bf16.mxu0 0
  %329 = vmatmul.mubr.bf16.gmra.mxu0 %v108
  %v330 = vpop.f32.mrf.mxu0
  %v331 = vadd.f32 %v134, %v330
  %v332 = vpop.f32.mrf.mxu0
  %v333 = vpop.f32.mrf.mxu0
  %v334 = vadd.f32 %v134, %v333
  %v335 = vpop.f32.mrf.mxu0
  %336 = vmatprep.mubr.bf16.mxu0 0
  %337 = vmatmul.mubr.bf16.gmra.mxu0 %v111
  %v338 = vpop.f32.mrf.mxu0
  %v339 = vadd.f32 %v134, %v338
  %v340 = vpop.f32.mrf.mxu0
  %v341 = vpop.f32.mrf.mxu0
  %v342 = vadd.f32 %v134, %v341
  %v343 = vpop.f32.mrf.mxu0
  %344 = vdwg.mxu0
  %v345 = vmax.f32 %v219, 0.0
  %v346 = vmax.f32 %v222, 0.0
  %v347 = vmax.f32 %v227, 0.0
  %v348 = vmax.f32 %v230, 0.0
  %v349 = vmax.f32 %v235, 0.0
  %v350 = vmax.f32 %v238, 0.0
  %v351 = vmax.f32 %v243, 0.0
  %v352 = vmax.f32 %v246, 0.0
  %v353 = vmax.f32 %v251, 0.0
  %v354 = vmax.f32 %v254, 0.0
  %v355 = vmax.f32 %v259, 0.0
  %v356 = vmax.f32 %v262, 0.0
  %v357 = vmax.f32 %v267, 0.0
  %v358 = vmax.f32 %v270, 0.0
  %v359 = vmax.f32 %v275, 0.0
  %v360 = vmax.f32 %v278, 0.0
  %v361 = vmax.f32 %v283, 0.0
  %v362 = vmax.f32 %v286, 0.0
  %v363 = vmax.f32 %v291, 0.0
  %v364 = vmax.f32 %v294, 0.0
  %v365 = vmax.f32 %v299, 0.0
  %v366 = vmax.f32 %v302, 0.0
  %v367 = vmax.f32 %v307, 0.0
  %v368 = vmax.f32 %v310, 0.0
  %v369 = vmax.f32 %v315, 0.0
  %v370 = vmax.f32 %v318, 0.0
  %v371 = vmax.f32 %v323, 0.0
  %v372 = vmax.f32 %v326, 0.0
  %v373 = vmax.f32 %v331, 0.0
  %v374 = vmax.f32 %v334, 0.0
  %v375 = vmax.f32 %v339, 0.0
  %v376 = vmax.f32 %v342, 0.0
  %v377 = vpack.c.bf16 %v346, %v345
  %v378 = vpack.c.bf16 %v348, %v347
  %v379 = vpack.c.bf16 %v350, %v349
  %v380 = vpack.c.bf16 %v352, %v351
  %v381 = vpack.c.bf16 %v354, %v353
  %v382 = vpack.c.bf16 %v356, %v355
  %v383 = vpack.c.bf16 %v358, %v357
  %v384 = vpack.c.bf16 %v360, %v359
  %v385 = vpack.c.bf16 %v362, %v361
  %v386 = vpack.c.bf16 %v364, %v363
  %v387 = vpack.c.bf16 %v366, %v365
  %v388 = vpack.c.bf16 %v368, %v367
  %v389 = vpack.c.bf16 %v370, %v369
  %v390 = vpack.c.bf16 %v372, %v371
  %v391 = vpack.c.bf16 %v374, %v373
  %v392 = vpack.c.bf16 %v376, %v375
  %s393 = scalar_lea.vmem %s1, 64
  %v394 = vld [vmem:[%s393] sm:$0xf]
  %v395 = vld [vmem:[%s393 + $0x4] sm:$0xf]
  %v396 = vld [vmem:[%s393 + $0x8] sm:$0xf]
  %v397 = vld [vmem:[%s393 + $0xc] sm:$0xf]
  %v398 = vld [vmem:[%s393 + $0x10] sm:$0xf]
  %v399 = vld [vmem:[%s393 + $0x14] sm:$0xf]
  %v400 = vld [vmem:[%s393 + $0x18] sm:$0xf]
  %v401 = vld [vmem:[%s393 + $0x1c] sm:$0xf]
  %v402 = vld [vmem:[%s393 + $0x20] sm:$0xf]
  %v403 = vld [vmem:[%s393 + $0x24] sm:$0xf]
  %v404 = vld [vmem:[%s393 + $0x28] sm:$0xf]
  %v405 = vld [vmem:[%s393 + $0x2c] sm:$0xf]
  %v406 = vld [vmem:[%s393 + $0x30] sm:$0xf]
  %v407 = vld [vmem:[%s393 + $0x34] sm:$0xf]
  %v408 = vld [vmem:[%s393 + $0x38] sm:$0xf]
  %v409 = vld [vmem:[%s393 + $0x3c] sm:$0xf]
  %s410 = scalar_lea.vmem %s2, 1
  %v411 = vld [vmem:[%s410] sm:$0x1]
  %v413 = vlaneseq
  %v414 = vshrl.u32 %v413, 7
  %v415 = vsub.s32 0, %v414
  %v416 = vrot.slane %v411, %v415
  %v434 = vunpack.c.l.b16 %v394
  %v435 = vunpack.c.l.b16 %v395
  %v436 = vunpack.c.l.b16 %v396
  %v437 = vunpack.c.l.b16 %v397
  %v438 = vunpack.c.l.b16 %v398
  %v439 = vunpack.c.l.b16 %v399
  %v440 = vunpack.c.l.b16 %v400
  %v441 = vunpack.c.l.b16 %v401
  %v442 = vunpack.c.l.b16 %v402
  %v443 = vunpack.c.l.b16 %v403
  %v444 = vunpack.c.l.b16 %v404
  %v445 = vunpack.c.l.b16 %v405
  %v446 = vunpack.c.l.b16 %v406
  %v447 = vunpack.c.l.b16 %v407
  %v448 = vunpack.c.l.b16 %v408
  %v449 = vunpack.c.l.b16 %v409
  %v450 = vpack.c.b16 %v435, %v434
  %v451 = vpack.c.b16 %v437, %v436
  %v452 = vpack.c.b16 %v439, %v438
  %v453 = vpack.c.b16 %v441, %v440
  %v454 = vpack.c.b16 %v443, %v442
  %v455 = vpack.c.b16 %v445, %v444
  %v456 = vpack.c.b16 %v447, %v446
  %v457 = vpack.c.b16 %v449, %v448
  %466 = vmatprep.subr.bf16.mxu0 0
  %467 = vmatpush1.bf16.msra.mxu0 %v457
  %468 = vmatprep.subr.bf16.mxu0 0
  %469 = vmatpush1.bf16.msra.mxu0 %v456
  %470 = vmatprep.subr.bf16.mxu0 0
  %471 = vmatpush1.bf16.msra.mxu0 %v455
  %472 = vmatprep.subr.bf16.mxu0 0
  %473 = vmatpush1.bf16.msra.mxu0 %v454
  %474 = vmatprep.subr.bf16.mxu0 0
  %475 = vmatpush1.bf16.msra.mxu0 %v453
  %476 = vmatprep.subr.bf16.mxu0 0
  %477 = vmatpush1.bf16.msra.mxu0 %v452
  %478 = vmatprep.subr.bf16.mxu0 0
  %479 = vmatpush1.bf16.msra.mxu0 %v451
  %480 = vmatprep.subr.bf16.mxu0 0
  %481 = vmatpush1.bf16.msra.mxu0 %v450
  %482 = vmatprep.subr.bf16.mxu0 0
  %483 = vmatpush2.bf16.msra.mxu0 0
  %484 = vmatprep.subr.bf16.mxu0 0
  %485 = vmatpush2.bf16.msra.mxu0 0
  %486 = vmatprep.subr.bf16.mxu0 0
  %487 = vmatpush2.bf16.msra.mxu0 0
  %488 = vmatprep.subr.bf16.mxu0 0
  %489 = vmatpush2.bf16.msra.mxu0 0
  %490 = vmatprep.subr.bf16.mxu0 0
  %491 = vmatpush2.bf16.msra.mxu0 0
  %492 = vmatprep.subr.bf16.mxu0 0
  %493 = vmatpush2.bf16.msra.mxu0 0
  %494 = vmatprep.subr.bf16.mxu0 0
  %495 = vmatpush2.bf16.msra.mxu0 0
  %496 = vmatprep.subr.bf16.mxu0 0
  %497 = vmatpush2.bf16.msra.mxu0 0
  %498 = vmatprep.mubr.bf16.mxu0 0
  %499 = vmatmul.mubr.bf16.gmra.mxu0 %v377
  %v500 = vpop.f32.mrf.mxu0
  %v501 = vadd.f32 %v416, %v500
  %v502 = vpop.f32.mrf.mxu0
  %v503 = vpop.f32.mrf.mxu0
  %v504 = vadd.f32 %v416, %v503
  %v505 = vpop.f32.mrf.mxu0
  %506 = vmatprep.mubr.bf16.mxu0 0
  %507 = vmatmul.mubr.bf16.gmra.mxu0 %v378
  %v508 = vpop.f32.mrf.mxu0
  %v509 = vadd.f32 %v416, %v508
  %v510 = vpop.f32.mrf.mxu0
  %v511 = vpop.f32.mrf.mxu0
  %v512 = vadd.f32 %v416, %v511
  %v513 = vpop.f32.mrf.mxu0
  %514 = vmatprep.mubr.bf16.mxu0 0
  %515 = vmatmul.mubr.bf16.gmra.mxu0 %v379
  %v516 = vpop.f32.mrf.mxu0
  %v517 = vadd.f32 %v416, %v516
  %v518 = vpop.f32.mrf.mxu0
  %v519 = vpop.f32.mrf.mxu0
  %v520 = vadd.f32 %v416, %v519
  %v521 = vpop.f32.mrf.mxu0
  %522 = vmatprep.mubr.bf16.mxu0 0
  %523 = vmatmul.mubr.bf16.gmra.mxu0 %v380
  %v524 = vpop.f32.mrf.mxu0
  %v525 = vadd.f32 %v416, %v524
  %v526 = vpop.f32.mrf.mxu0
  %v527 = vpop.f32.mrf.mxu0
  %v528 = vadd.f32 %v416, %v527
  %v529 = vpop.f32.mrf.mxu0
  %530 = vmatprep.mubr.bf16.mxu0 0
  %531 = vmatmul.mubr.bf16.gmra.mxu0 %v381
  %v532 = vpop.f32.mrf.mxu0
  %v533 = vadd.f32 %v416, %v532
  %v534 = vpop.f32.mrf.mxu0
  %v535 = vpop.f32.mrf.mxu0
  %v536 = vadd.f32 %v416, %v535
  %v537 = vpop.f32.mrf.mxu0
  %538 = vmatprep.mubr.bf16.mxu0 0
  %539 = vmatmul.mubr.bf16.gmra.mxu0 %v382
  %v540 = vpop.f32.mrf.mxu0
  %v541 = vadd.f32 %v416, %v540
  %v542 = vpop.f32.mrf.mxu0
  %v543 = vpop.f32.mrf.mxu0
  %v544 = vadd.f32 %v416, %v543
  %v545 = vpop.f32.mrf.mxu0
  %546 = vmatprep.mubr.bf16.mxu0 0
  %547 = vmatmul.mubr.bf16.gmra.mxu0 %v383
  %v548 = vpop.f32.mrf.mxu0
  %v549 = vadd.f32 %v416, %v548
  %v550 = vpop.f32.mrf.mxu0
  %v551 = vpop.f32.mrf.mxu0
  %v552 = vadd.f32 %v416, %v551
  %v553 = vpop.f32.mrf.mxu0
  %554 = vmatprep.mubr.bf16.mxu0 0
  %555 = vmatmul.mubr.bf16.gmra.mxu0 %v384
  %v556 = vpop.f32.mrf.mxu0
  %v557 = vadd.f32 %v416, %v556
  %v558 = vpop.f32.mrf.mxu0
  %v559 = vpop.f32.mrf.mxu0
  %v560 = vadd.f32 %v416, %v559
  %v561 = vpop.f32.mrf.mxu0
  %562 = vmatprep.mubr.bf16.mxu0 0
  %563 = vmatmul.mubr.bf16.gmra.mxu0 %v385
  %v564 = vpop.f32.mrf.mxu0
  %v565 = vadd.f32 %v416, %v564
  %v566 = vpop.f32.mrf.mxu0
  %v567 = vpop.f32.mrf.mxu0
  %v568 = vadd.f32 %v416, %v567
  %v569 = vpop.f32.mrf.mxu0
  %570 = vmatprep.mubr.bf16.mxu0 0
  %571 = vmatmul.mubr.bf16.gmra.mxu0 %v386
  %v572 = vpop.f32.mrf.mxu0
  %v573 = vadd.f32 %v416, %v572
  %v574 = vpop.f32.mrf.mxu0
  %v575 = vpop.f32.mrf.mxu0
  %v576 = vadd.f32 %v416, %v575
  %v577 = vpop.f32.mrf.mxu0
  %578 = vmatprep.mubr.bf16.mxu0 0
  %579 = vmatmul.mubr.bf16.gmra.mxu0 %v387
  %v580 = vpop.f32.mrf.mxu0
  %v581 = vadd.f32 %v416, %v580
  %v582 = vpop.f32.mrf.mxu0
  %v583 = vpop.f32.mrf.mxu0
  %v584 = vadd.f32 %v416, %v583
  %v585 = vpop.f32.mrf.mxu0
  %586 = vmatprep.mubr.bf16.mxu0 0
  %587 = vmatmul.mubr.bf16.gmra.mxu0 %v388
  %v588 = vpop.f32.mrf.mxu0
  %v589 = vadd.f32 %v416, %v588
  %v590 = vpop.f32.mrf.mxu0
  %v591 = vpop.f32.mrf.mxu0
  %v592 = vadd.f32 %v416, %v591
  %v593 = vpop.f32.mrf.mxu0
  %594 = vmatprep.mubr.bf16.mxu0 0
  %595 = vmatmul.mubr.bf16.gmra.mxu0 %v389
  %v596 = vpop.f32.mrf.mxu0
  %v597 = vadd.f32 %v416, %v596
  %v598 = vpop.f32.mrf.mxu0
  %v599 = vpop.f32.mrf.mxu0
  %v600 = vadd.f32 %v416, %v599
  %v601 = vpop.f32.mrf.mxu0
  %602 = vmatprep.mubr.bf16.mxu0 0
  %603 = vmatmul.mubr.bf16.gmra.mxu0 %v390
  %v604 = vpop.f32.mrf.mxu0
  %v605 = vadd.f32 %v416, %v604
  %v606 = vpop.f32.mrf.mxu0
  %v607 = vpop.f32.mrf.mxu0
  %v608 = vadd.f32 %v416, %v607
  %v609 = vpop.f32.mrf.mxu0
  %610 = vmatprep.mubr.bf16.mxu0 0
  %611 = vmatmul.mubr.bf16.gmra.mxu0 %v391
  %v612 = vpop.f32.mrf.mxu0
  %v613 = vadd.f32 %v416, %v612
  %v614 = vpop.f32.mrf.mxu0
  %v615 = vpop.f32.mrf.mxu0
  %v616 = vadd.f32 %v416, %v615
  %v617 = vpop.f32.mrf.mxu0
  %618 = vmatprep.mubr.bf16.mxu0 0
  %619 = vmatmul.mubr.bf16.gmra.mxu0 %v392
  %v620 = vpop.f32.mrf.mxu0
  %v621 = vadd.f32 %v416, %v620
  %v622 = vpop.f32.mrf.mxu0
  %v623 = vpop.f32.mrf.mxu0
  %v624 = vadd.f32 %v416, %v623
  %v625 = vpop.f32.mrf.mxu0
  %626 = vdwg.mxu0
  %v627 = vmax.f32 %v501, 0.0
  %v628 = vmax.f32 %v504, 0.0
  %v629 = vmax.f32 %v509, 0.0
  %v630 = vmax.f32 %v512, 0.0
  %v631 = vmax.f32 %v517, 0.0
  %v632 = vmax.f32 %v520, 0.0
  %v633 = vmax.f32 %v525, 0.0
  %v634 = vmax.f32 %v528, 0.0
  %v635 = vmax.f32 %v533, 0.0
  %v636 = vmax.f32 %v536, 0.0
  %v637 = vmax.f32 %v541, 0.0
  %v638 = vmax.f32 %v544, 0.0
  %v639 = vmax.f32 %v549, 0.0
  %v640 = vmax.f32 %v552, 0.0
  %v641 = vmax.f32 %v557, 0.0
  %v642 = vmax.f32 %v560, 0.0
  %v643 = vmax.f32 %v565, 0.0
  %v644 = vmax.f32 %v568, 0.0
  %v645 = vmax.f32 %v573, 0.0
  %v646 = vmax.f32 %v576, 0.0
  %v647 = vmax.f32 %v581, 0.0
  %v648 = vmax.f32 %v584, 0.0
  %v649 = vmax.f32 %v589, 0.0
  %v650 = vmax.f32 %v592, 0.0
  %v651 = vmax.f32 %v597, 0.0
  %v652 = vmax.f32 %v600, 0.0
  %v653 = vmax.f32 %v605, 0.0
  %v654 = vmax.f32 %v608, 0.0
  %v655 = vmax.f32 %v613, 0.0
  %v656 = vmax.f32 %v616, 0.0
  %v657 = vmax.f32 %v621, 0.0
  %v658 = vmax.f32 %v624, 0.0
  %v659 = vpack.c.bf16 %v628, %v627
  %v660 = vpack.c.bf16 %v630, %v629
  %v661 = vpack.c.bf16 %v632, %v631
  %v662 = vpack.c.bf16 %v634, %v633
  %v663 = vpack.c.bf16 %v636, %v635
  %v664 = vpack.c.bf16 %v638, %v637
  %v665 = vpack.c.bf16 %v640, %v639
  %v666 = vpack.c.bf16 %v642, %v641
  %v667 = vpack.c.bf16 %v644, %v643
  %v668 = vpack.c.bf16 %v646, %v645
  %v669 = vpack.c.bf16 %v648, %v647
  %v670 = vpack.c.bf16 %v650, %v649
  %v671 = vpack.c.bf16 %v652, %v651
  %v672 = vpack.c.bf16 %v654, %v653
  %v673 = vpack.c.bf16 %v656, %v655
  %v674 = vpack.c.bf16 %v658, %v657
  %s675 = scalar_lea.vmem %s1, 128
  %v676 = vld [vmem:[%s675] sm:$0xf]
  %v677 = vld [vmem:[%s675 + $0x4] sm:$0xf]
  %v678 = vld [vmem:[%s675 + $0x8] sm:$0xf]
  %v679 = vld [vmem:[%s675 + $0xc] sm:$0xf]
  %v680 = vld [vmem:[%s675 + $0x10] sm:$0xf]
  %v681 = vld [vmem:[%s675 + $0x14] sm:$0xf]
  %v682 = vld [vmem:[%s675 + $0x18] sm:$0xf]
  %v683 = vld [vmem:[%s675 + $0x1c] sm:$0xf]
  %v684 = vld [vmem:[%s675 + $0x20] sm:$0xf]
  %v685 = vld [vmem:[%s675 + $0x24] sm:$0xf]
  %v686 = vld [vmem:[%s675 + $0x28] sm:$0xf]
  %v687 = vld [vmem:[%s675 + $0x2c] sm:$0xf]
  %v688 = vld [vmem:[%s675 + $0x30] sm:$0xf]
  %v689 = vld [vmem:[%s675 + $0x34] sm:$0xf]
  %v690 = vld [vmem:[%s675 + $0x38] sm:$0xf]
  %v691 = vld [vmem:[%s675 + $0x3c] sm:$0xf]
  %s692 = scalar_lea.vmem %s2, 2
  %v693 = vld [vmem:[%s692] sm:$0x1]
  %v695 = vlaneseq
  %v696 = vshrl.u32 %v695, 7
  %v697 = vsub.s32 0, %v696
  %v698 = vrot.slane %v693, %v697
  %v716 = vunpack.c.l.b16 %v676
  %v717 = vunpack.c.l.b16 %v677
  %v718 = vunpack.c.l.b16 %v678
  %v719 = vunpack.c.l.b16 %v679
  %v720 = vunpack.c.l.b16 %v680
  %v721 = vunpack.c.l.b16 %v681
  %v722 = vunpack.c.l.b16 %v682
  %v723 = vunpack.c.l.b16 %v683
  %v724 = vunpack.c.l.b16 %v684
  %v725 = vunpack.c.l.b16 %v685
  %v726 = vunpack.c.l.b16 %v686
  %v727 = vunpack.c.l.b16 %v687
  %v728 = vunpack.c.l.b16 %v688
  %v729 = vunpack.c.l.b16 %v689
  %v730 = vunpack.c.l.b16 %v690
  %v731 = vunpack.c.l.b16 %v691
  %v732 = vpack.c.b16 %v717, %v716
  %v733 = vpack.c.b16 %v719, %v718
  %v734 = vpack.c.b16 %v721, %v720
  %v735 = vpack.c.b16 %v723, %v722
  %v736 = vpack.c.b16 %v725, %v724
  %v737 = vpack.c.b16 %v727, %v726
  %v738 = vpack.c.b16 %v729, %v728
  %v739 = vpack.c.b16 %v731, %v730
  %748 = vmatprep.subr.bf16.mxu0 0
  %749 = vmatpush1.bf16.msra.mxu0 %v739
  %750 = vmatprep.subr.bf16.mxu0 0
  %751 = vmatpush1.bf16.msra.mxu0 %v738
  %752 = vmatprep.subr.bf16.mxu0 0
  %753 = vmatpush1.bf16.msra.mxu0 %v737
  %754 = vmatprep.subr.bf16.mxu0 0
  %755 = vmatpush1.bf16.msra.mxu0 %v736
  %756 = vmatprep.subr.bf16.mxu0 0
  %757 = vmatpush1.bf16.msra.mxu0 %v735
  %758 = vmatprep.subr.bf16.mxu0 0
  %759 = vmatpush1.bf16.msra.mxu0 %v734
  %760 = vmatprep.subr.bf16.mxu0 0
  %761 = vmatpush1.bf16.msra.mxu0 %v733
  %762 = vmatprep.subr.bf16.mxu0 0
  %763 = vmatpush1.bf16.msra.mxu0 %v732
  %764 = vmatprep.subr.bf16.mxu0 0
  %765 = vmatpush2.bf16.msra.mxu0 0
  %766 = vmatprep.subr.bf16.mxu0 0
  %767 = vmatpush2.bf16.msra.mxu0 0
  %768 = vmatprep.subr.bf16.mxu0 0
  %769 = vmatpush2.bf16.msra.mxu0 0
  %770 = vmatprep.subr.bf16.mxu0 0
  %771 = vmatpush2.bf16.msra.mxu0 0
  %772 = vmatprep.subr.bf16.mxu0 0
  %773 = vmatpush2.bf16.msra.mxu0 0
  %774 = vmatprep.subr.bf16.mxu0 0
  %775 = vmatpush2.bf16.msra.mxu0 0
  %776 = vmatprep.subr.bf16.mxu0 0
  %777 = vmatpush2.bf16.msra.mxu0 0
  %778 = vmatprep.subr.bf16.mxu0 0
  %779 = vmatpush2.bf16.msra.mxu0 0
  %780 = vmatprep.mubr.bf16.mxu0 0
  %781 = vmatmul.mubr.bf16.gmra.mxu0 %v659
  %v782 = vpop.f32.mrf.mxu0
  %v783 = vadd.f32 %v698, %v782
  %v784 = vpop.f32.mrf.mxu0
  %v785 = vpop.f32.mrf.mxu0
  %v786 = vadd.f32 %v698, %v785
  %v787 = vpop.f32.mrf.mxu0
  %788 = vmatprep.mubr.bf16.mxu0 0
  %789 = vmatmul.mubr.bf16.gmra.mxu0 %v660
  %v790 = vpop.f32.mrf.mxu0
  %v791 = vadd.f32 %v698, %v790
  %v792 = vpop.f32.mrf.mxu0
  %v793 = vpop.f32.mrf.mxu0
  %v794 = vadd.f32 %v698, %v793
  %v795 = vpop.f32.mrf.mxu0
  %796 = vmatprep.mubr.bf16.mxu0 0
  %797 = vmatmul.mubr.bf16.gmra.mxu0 %v661
  %v798 = vpop.f32.mrf.mxu0
  %v799 = vadd.f32 %v698, %v798
  %v800 = vpop.f32.mrf.mxu0
  %v801 = vpop.f32.mrf.mxu0
  %v802 = vadd.f32 %v698, %v801
  %v803 = vpop.f32.mrf.mxu0
  %804 = vmatprep.mubr.bf16.mxu0 0
  %805 = vmatmul.mubr.bf16.gmra.mxu0 %v662
  %v806 = vpop.f32.mrf.mxu0
  %v807 = vadd.f32 %v698, %v806
  %v808 = vpop.f32.mrf.mxu0
  %v809 = vpop.f32.mrf.mxu0
  %v810 = vadd.f32 %v698, %v809
  %v811 = vpop.f32.mrf.mxu0
  %812 = vmatprep.mubr.bf16.mxu0 0
  %813 = vmatmul.mubr.bf16.gmra.mxu0 %v663
  %v814 = vpop.f32.mrf.mxu0
  %v815 = vadd.f32 %v698, %v814
  %v816 = vpop.f32.mrf.mxu0
  %v817 = vpop.f32.mrf.mxu0
  %v818 = vadd.f32 %v698, %v817
  %v819 = vpop.f32.mrf.mxu0
  %820 = vmatprep.mubr.bf16.mxu0 0
  %821 = vmatmul.mubr.bf16.gmra.mxu0 %v664
  %v822 = vpop.f32.mrf.mxu0
  %v823 = vadd.f32 %v698, %v822
  %v824 = vpop.f32.mrf.mxu0
  %v825 = vpop.f32.mrf.mxu0
  %v826 = vadd.f32 %v698, %v825
  %v827 = vpop.f32.mrf.mxu0
  %828 = vmatprep.mubr.bf16.mxu0 0
  %829 = vmatmul.mubr.bf16.gmra.mxu0 %v665
  %v830 = vpop.f32.mrf.mxu0
  %v831 = vadd.f32 %v698, %v830
  %v832 = vpop.f32.mrf.mxu0
  %v833 = vpop.f32.mrf.mxu0
  %v834 = vadd.f32 %v698, %v833
  %v835 = vpop.f32.mrf.mxu0
  %836 = vmatprep.mubr.bf16.mxu0 0
  %837 = vmatmul.mubr.bf16.gmra.mxu0 %v666
  %v838 = vpop.f32.mrf.mxu0
  %v839 = vadd.f32 %v698, %v838
  %v840 = vpop.f32.mrf.mxu0
  %v841 = vpop.f32.mrf.mxu0
  %v842 = vadd.f32 %v698, %v841
  %v843 = vpop.f32.mrf.mxu0
  %844 = vmatprep.mubr.bf16.mxu0 0
  %845 = vmatmul.mubr.bf16.gmra.mxu0 %v667
  %v846 = vpop.f32.mrf.mxu0
  %v847 = vadd.f32 %v698, %v846
  %v848 = vpop.f32.mrf.mxu0
  %v849 = vpop.f32.mrf.mxu0
  %v850 = vadd.f32 %v698, %v849
  %v851 = vpop.f32.mrf.mxu0
  %852 = vmatprep.mubr.bf16.mxu0 0
  %853 = vmatmul.mubr.bf16.gmra.mxu0 %v668
  %v854 = vpop.f32.mrf.mxu0
  %v855 = vadd.f32 %v698, %v854
  %v856 = vpop.f32.mrf.mxu0
  %v857 = vpop.f32.mrf.mxu0
  %v858 = vadd.f32 %v698, %v857
  %v859 = vpop.f32.mrf.mxu0
  %860 = vmatprep.mubr.bf16.mxu0 0
  %861 = vmatmul.mubr.bf16.gmra.mxu0 %v669
  %v862 = vpop.f32.mrf.mxu0
  %v863 = vadd.f32 %v698, %v862
  %v864 = vpop.f32.mrf.mxu0
  %v865 = vpop.f32.mrf.mxu0
  %v866 = vadd.f32 %v698, %v865
  %v867 = vpop.f32.mrf.mxu0
  %868 = vmatprep.mubr.bf16.mxu0 0
  %869 = vmatmul.mubr.bf16.gmra.mxu0 %v670
  %v870 = vpop.f32.mrf.mxu0
  %v871 = vadd.f32 %v698, %v870
  %v872 = vpop.f32.mrf.mxu0
  %v873 = vpop.f32.mrf.mxu0
  %v874 = vadd.f32 %v698, %v873
  %v875 = vpop.f32.mrf.mxu0
  %876 = vmatprep.mubr.bf16.mxu0 0
  %877 = vmatmul.mubr.bf16.gmra.mxu0 %v671
  %v878 = vpop.f32.mrf.mxu0
  %v879 = vadd.f32 %v698, %v878
  %v880 = vpop.f32.mrf.mxu0
  %v881 = vpop.f32.mrf.mxu0
  %v882 = vadd.f32 %v698, %v881
  %v883 = vpop.f32.mrf.mxu0
  %884 = vmatprep.mubr.bf16.mxu0 0
  %885 = vmatmul.mubr.bf16.gmra.mxu0 %v672
  %v886 = vpop.f32.mrf.mxu0
  %v887 = vadd.f32 %v698, %v886
  %v888 = vpop.f32.mrf.mxu0
  %v889 = vpop.f32.mrf.mxu0
  %v890 = vadd.f32 %v698, %v889
  %v891 = vpop.f32.mrf.mxu0
  %892 = vmatprep.mubr.bf16.mxu0 0
  %893 = vmatmul.mubr.bf16.gmra.mxu0 %v673
  %v894 = vpop.f32.mrf.mxu0
  %v895 = vadd.f32 %v698, %v894
  %v896 = vpop.f32.mrf.mxu0
  %v897 = vpop.f32.mrf.mxu0
  %v898 = vadd.f32 %v698, %v897
  %v899 = vpop.f32.mrf.mxu0
  %900 = vmatprep.mubr.bf16.mxu0 0
  %901 = vmatmul.mubr.bf16.gmra.mxu0 %v674
  %v902 = vpop.f32.mrf.mxu0
  %v903 = vadd.f32 %v698, %v902
  %v904 = vpop.f32.mrf.mxu0
  %v905 = vpop.f32.mrf.mxu0
  %v906 = vadd.f32 %v698, %v905
  %v907 = vpop.f32.mrf.mxu0
  %908 = vdwg.mxu0
  %v909 = vpack.c.bf16 %v786, %v783
  %v910 = vpack.c.bf16 %v794, %v791
  %v911 = vpack.c.bf16 %v802, %v799
  %v912 = vpack.c.bf16 %v810, %v807
  %v913 = vpack.c.bf16 %v818, %v815
  %v914 = vpack.c.bf16 %v826, %v823
  %v915 = vpack.c.bf16 %v834, %v831
  %v916 = vpack.c.bf16 %v842, %v839
  %v917 = vpack.c.bf16 %v850, %v847
  %v918 = vpack.c.bf16 %v858, %v855
  %v919 = vpack.c.bf16 %v866, %v863
  %v920 = vpack.c.bf16 %v874, %v871
  %v921 = vpack.c.bf16 %v882, %v879
  %v922 = vpack.c.bf16 %v890, %v887
  %v923 = vpack.c.bf16 %v898, %v895
  %v924 = vpack.c.bf16 %v906, %v903
  %v941 = vunpack.c.l.b16 %v909
  %v942 = vunpack.c.h.b16 %v909
  %v943 = vunpack.c.l.b16 %v910
  %v944 = vunpack.c.h.b16 %v910
  %v945 = vunpack.c.l.b16 %v911
  %v946 = vunpack.c.h.b16 %v911
  %v947 = vunpack.c.l.b16 %v912
  %v948 = vunpack.c.h.b16 %v912
  %v949 = vunpack.c.l.b16 %v913
  %v950 = vunpack.c.h.b16 %v913
  %v951 = vunpack.c.l.b16 %v914
  %v952 = vunpack.c.h.b16 %v914
  %v953 = vunpack.c.l.b16 %v915
  %v954 = vunpack.c.h.b16 %v915
  %v955 = vunpack.c.l.b16 %v916
  %v956 = vunpack.c.h.b16 %v916
  %v957 = vunpack.c.l.b16 %v917
  %v958 = vunpack.c.h.b16 %v917
  %v959 = vunpack.c.l.b16 %v918
  %v960 = vunpack.c.h.b16 %v918
  %v961 = vunpack.c.l.b16 %v919
  %v962 = vunpack.c.h.b16 %v919
  %v963 = vunpack.c.l.b16 %v920
  %v964 = vunpack.c.h.b16 %v920
  %v965 = vunpack.c.l.b16 %v921
  %v966 = vunpack.c.h.b16 %v921
  %v967 = vunpack.c.l.b16 %v922
  %v968 = vunpack.c.h.b16 %v922
  %v969 = vunpack.c.l.b16 %v923
  %v970 = vunpack.c.h.b16 %v923
  %v971 = vunpack.c.l.b16 %v924
  %v972 = vunpack.c.h.b16 %v924
  %v973 = vpack.c.b16 %v941, %v941
  %v974 = vpack.c.b16 %v942, %v942
  %v975 = vpack.c.b16 %v943, %v943
  %v976 = vpack.c.b16 %v944, %v944
  %v977 = vpack.c.b16 %v945, %v945
  %v978 = vpack.c.b16 %v946, %v946
  %v979 = vpack.c.b16 %v947, %v947
  %v980 = vpack.c.b16 %v948, %v948
  %v981 = vpack.c.b16 %v949, %v949
  %v982 = vpack.c.b16 %v950, %v950
  %v983 = vpack.c.b16 %v951, %v951
  %v984 = vpack.c.b16 %v952, %v952
  %v985 = vpack.c.b16 %v953, %v953
  %v986 = vpack.c.b16 %v954, %v954
  %v987 = vpack.c.b16 %v955, %v955
  %v988 = vpack.c.b16 %v956, %v956
  %v989 = vpack.c.b16 %v957, %v957
  %v990 = vpack.c.b16 %v958, %v958
  %v991 = vpack.c.b16 %v959, %v959
  %v992 = vpack.c.b16 %v960, %v960
  %v993 = vpack.c.b16 %v961, %v961
  %v994 = vpack.c.b16 %v962, %v962
  %v995 = vpack.c.b16 %v963, %v963
  %v996 = vpack.c.b16 %v964, %v964
  %v997 = vpack.c.b16 %v965, %v965
  %v998 = vpack.c.b16 %v966, %v966
  %v999 = vpack.c.b16 %v967, %v967
  %v1000 = vpack.c.b16 %v968, %v968
  %v1001 = vpack.c.b16 %v969, %v969
  %v1002 = vpack.c.b16 %v970, %v970
  %v1003 = vpack.c.b16 %v971, %v971
  %v1004 = vpack.c.b16 %v972, %v972
  %1037 = vst [vmem:[%s3] sm:$0xf] %v973
  %1038 = vst [vmem:[%s3 + $0x4] sm:$0xf] %v974
  %1039 = vst [vmem:[%s3 + $0x8] sm:$0xf] %v975
  %1040 = vst [vmem:[%s3 + $0xc] sm:$0xf] %v976
  %1041 = vst [vmem:[%s3 + $0x10] sm:$0xf] %v977
  %1042 = vst [vmem:[%s3 + $0x14] sm:$0xf] %v978
  %1043 = vst [vmem:[%s3 + $0x18] sm:$0xf] %v979
  %1044 = vst [vmem:[%s3 + $0x1c] sm:$0xf] %v980
  %1045 = vst [vmem:[%s3 + $0x20] sm:$0xf] %v981
  %1046 = vst [vmem:[%s3 + $0x24] sm:$0xf] %v982
  %1047 = vst [vmem:[%s3 + $0x28] sm:$0xf] %v983
  %1048 = vst [vmem:[%s3 + $0x2c] sm:$0xf] %v984
  %1049 = vst [vmem:[%s3 + $0x30] sm:$0xf] %v985
  %1050 = vst [vmem:[%s3 + $0x34] sm:$0xf] %v986
  %1051 = vst [vmem:[%s3 + $0x38] sm:$0xf] %v987
  %1052 = vst [vmem:[%s3 + $0x3c] sm:$0xf] %v988
  %1053 = vst [vmem:[%s3 + $0x40] sm:$0xf] %v989
  %1054 = vst [vmem:[%s3 + $0x44] sm:$0xf] %v990
  %1055 = vst [vmem:[%s3 + $0x48] sm:$0xf] %v991
  %1056 = vst [vmem:[%s3 + $0x4c] sm:$0xf] %v992
  %1057 = vst [vmem:[%s3 + $0x50] sm:$0xf] %v993
  %1058 = vst [vmem:[%s3 + $0x54] sm:$0xf] %v994
  %1059 = vst [vmem:[%s3 + $0x58] sm:$0xf] %v995
  %1060 = vst [vmem:[%s3 + $0x5c] sm:$0xf] %v996
  %1061 = vst [vmem:[%s3 + $0x60] sm:$0xf] %v997
  %1062 = vst [vmem:[%s3 + $0x64] sm:$0xf] %v998
  %1063 = vst [vmem:[%s3 + $0x68] sm:$0xf] %v999
  %1064 = vst [vmem:[%s3 + $0x6c] sm:$0xf] %v1000
  %1065 = vst [vmem:[%s3 + $0x70] sm:$0xf] %v1001
  %1066 = vst [vmem:[%s3 + $0x74] sm:$0xf] %v1002
  %1067 = vst [vmem:[%s3 + $0x78] sm:$0xf] %v1003
  %1068 = vst [vmem:[%s3 + $0x7c] sm:$0xf] %v1004
  // Predicated region
  $region14: #{dqn_forward.1} parent=0 // pred_check
    _
  $region15: #{dqn_forward.1} parent=0 // pred_check_branch
    %1070 = sbr.rel (0) target = $region17
  $region16: #{dqn_forward.1} parent=0 // pred_region
    _
  $region17: #{dqn_forward.1} parent=0 // pred_fallthru
    _
  // Predicated region
  $region18: #{dqn_forward.1} parent=0 // pred_check
    _
  $region19: #{dqn_forward.1} parent=0 // pred_check_branch
    %1072 = sbr.rel (0) target = $region21
  $region20: #{dqn_forward.1} parent=0 // pred_region
    _
  $region21: #{dqn_forward.1} parent=0 // pred_fallthru
    _

</llo_original>
